<compile_context>
chip_gen: v7x
topology: tpu7x:2x2x1
jax: 0.10.0
libtpu: 0.0.40
codegen_flags: <defaults>
</compile_context>

<pallas_src>
import functools

import jax
import jax.numpy as jnp
from jax.experimental import pallas as pl
from jax.experimental.pallas import tpu as pltpu

_EPS = 1e-6
_LANES = 128
_SUBLANES = 8
_MAX_BLOCK_ROWS = 4096          # 4096 x 128 x 4B = 2 MiB per input block (f32)
_PRED_PAD = -30000.0            # sigmoid(-30000) == 0.0 exactly in f32/bf16


def _round_up(x, m):
    return ((x + m - 1) // m) * m


def _cel_kernel(pred_ref, target_ref, out_ref, s_acc, i_acc, *, block_rows):
    # s_acc / i_acc: (8, 128) f32 VMEM accumulators for sum(p + t) and sum(p*t).
    @pl.when(pl.program_id(0) == 0)
    def _init():
        s_acc[...] = jnp.zeros_like(s_acc)
        i_acc[...] = jnp.zeros_like(i_acc)

    p = jax.nn.sigmoid(pred_ref[...].astype(jnp.float32))
    t = target_ref[...].astype(jnp.float32)
    s = p + t
    inter = p * t

    # Fold (block_rows, 128) -> (8, 128) with VPU-only adds (leading-axis
    # split does not cross the (8,128) tile boundary, so the reshape is free).
    n_sub = block_rows // _SUBLANES
    s_acc[...] += s.reshape(n_sub, _SUBLANES, _LANES).sum(axis=0)
    i_acc[...] += inter.reshape(n_sub, _SUBLANES, _LANES).sum(axis=0)

    # Single cross-lane/sublane reduce + scalar division on the last step only.
    @pl.when(pl.program_id(0) == pl.num_programs(0) - 1)
    def _finalize():
        S = jnp.sum(s_acc[...])
        I = jnp.sum(i_acc[...])
        out_ref[0, 0] = (S - 2.0 * I) / (S + jnp.float32(_EPS))


def cel_loss(pred, target):
    """Pallas implementation of CEL.forward; returns a scalar float32."""
    assert pred.shape == target.shape, "pred / target shape mismatch"

    total = 1
    for d in pred.shape:
        total *= d

    rows = -(-total // _LANES)                       # ceil-div
    block_rows = min(_MAX_BLOCK_ROWS, _round_up(rows, _SUBLANES))
    rows_padded = _round_up(rows, block_rows)
    pad_elems = rows_padded * _LANES - total

    pred_flat = pred.reshape(-1)
    target_flat = target.reshape(-1)
    if pad_elems:
        # sigmoid(_PRED_PAD) == 0 and target pad == 0  ->  zero contribution.
        pred_flat = jnp.pad(pred_flat, (0, pad_elems), constant_values=_PRED_PAD)
        target_flat = jnp.pad(target_flat, (0, pad_elems), constant_values=0.0)

    pred2d = pred_flat.reshape(rows_padded, _LANES)
    target2d = target_flat.reshape(rows_padded, _LANES)

    grid = (rows_padded // block_rows,)

    cost = pl.CostEstimate(
        flops=6 * total,
        transcendentals=total,
        bytes_accessed=pred.size * pred.dtype.itemsize
        + target.size * target.dtype.itemsize
        + 4,
    )

    out = pl.pallas_call(
        functools.partial(_cel_kernel, block_rows=block_rows),
        out_shape=jax.ShapeDtypeStruct((1, 1), jnp.float32),
        grid_spec=pltpu.PrefetchScalarGridSpec(
            num_scalar_prefetch=0,
            grid=grid,
            in_specs=[
                pl.BlockSpec((block_rows, _LANES), lambda i: (i, 0)),
                pl.BlockSpec((block_rows, _LANES), lambda i: (i, 0)),
            ],
            out_specs=pl.BlockSpec(memory_space=pltpu.MemorySpace.SMEM),
            scratch_shapes=[
                pltpu.VMEM((_SUBLANES, _LANES), jnp.float32),   # sum(p + t)
                pltpu.VMEM((_SUBLANES, _LANES), jnp.float32),   # sum(p * t)
            ],
        ),
        compiler_params=pltpu.CompilerParams(
            dimension_semantics=("arbitrary",),
        ),
        cost_estimate=cost,
    )(pred2d, target2d)
    return out[0, 0]


def cel_ref(pred, target):
    """Pure-JAX reference identical to the PyTorch forward."""
    p = jax.nn.sigmoid(pred.astype(jnp.float32))
    t = target.astype(jnp.float32)
    inter = p * t
    num = jnp.sum(p - inter) + jnp.sum(t - inter)
    den = jnp.sum(p) + jnp.sum(t)
    return num / (den + _EPS)


if __name__ == "__main__":
    key = jax.random.PRNGKey(0)
    k1, k2, k3, k4 = jax.random.split(key, 4)

    # Small NCHW shape consistent with the module: batch=2, channels=4, 16x16.
    shape = (2, 4, 16, 16)
    pred = jax.random.normal(k1, shape, dtype=jnp.float32)                  # logits
    target = (jax.random.uniform(k2, shape) > 0.5).astype(jnp.float32)      # binary mask

    loss = cel_loss(pred, target)
    jax.block_until_ready(loss)
    ref = cel_ref(pred, target)
    assert jnp.allclose(loss, ref, rtol=1e-5, atol=1e-6), (loss, ref)

    # Odd (non-multiple-of-1024) shape to exercise the padding path.
    shape2 = (2, 3, 17, 13)
    pred2 = jax.random.normal(k3, shape2, dtype=jnp.float32)
    target2 = (jax.random.uniform(k4, shape2) > 0.5).astype(jnp.float32)

    loss2 = cel_loss(pred2, target2)
    jax.block_until_ready(loss2)
    ref2 = cel_ref(pred2, target2)
    assert jnp.allclose(loss2, ref2, rtol=1e-5, atol=1e-6), (loss2, ref2)

    print("KERNEL_OK")
</pallas_src>

<mosaic_0001>
module attributes {stable_mosaic.version = 11 : i64} {
  func.func @_cel_kernel(%arg0: i32, %arg1: memref<16x128xf32, #tpu.memory_space<vmem>>, %arg2: memref<16x128xf32, #tpu.memory_space<vmem>>, %arg3: memref<1x1xf32, #tpu.memory_space<smem>>, %arg4: memref<8x128xf32, #tpu.memory_space<vmem>>, %arg5: memref<8x128xf32, #tpu.memory_space<vmem>>) attributes {dimension_semantics = [#tpu.dimension_semantics<arbitrary>], iteration_bounds = array<i64: 1>, scalar_prefetch = 0 : i64, scratch_operands = 2 : i64, tpu.core_type = #tpu.core_type<tc>, window_params = [{transform_indices = @transform_0, window_bounds = array<i64: 16, 128>}, {transform_indices = @transform_1, window_bounds = array<i64: 16, 128>}, {transform_indices = @transform_2, window_bounds = array<i64: 1, 1>}]} {
    %c0_i32 = arith.constant 0 : i32
    %0 = arith.cmpi eq, %arg0, %c0_i32 : i32
    %1 = arith.extui %0 : i1 to i32
    %c0_i32_0 = arith.constant 0 : i32
    %2 = arith.cmpi ne, %1, %c0_i32_0 : i32
    scf.if %2 {
      %cst_16 = arith.constant 0.000000e+00 : f32
      %25 = vector.broadcast %cst_16 : f32 to vector<8x128xf32>
      %c0_17 = arith.constant 0 : index
      %c0_18 = arith.constant 0 : index
      %26 = vector.load %arg4[%c0_17, %c0_18] : memref<8x128xf32, #tpu.memory_space<vmem>>, vector<8x128xf32>
      tpu.vector_store %arg4[%c0_17, %c0_18], %25 {strides = array<i32>} : memref<8x128xf32, #tpu.memory_space<vmem>>, vector<8x128xf32>,
      %cst_19 = arith.constant 0.000000e+00 : f32
      %27 = vector.broadcast %cst_19 : f32 to vector<8x128xf32>
      %c0_20 = arith.constant 0 : index
      %c0_21 = arith.constant 0 : index
      %28 = vector.load %arg5[%c0_20, %c0_21] : memref<8x128xf32, #tpu.memory_space<vmem>>, vector<8x128xf32>
      tpu.vector_store %arg5[%c0_20, %c0_21], %27 {strides = array<i32>} : memref<8x128xf32, #tpu.memory_space<vmem>>, vector<8x128xf32>,
    } else {
    }
    %c0 = arith.constant 0 : index
    %c0_1 = arith.constant 0 : index
    %3 = vector.load %arg1[%c0, %c0_1] : memref<16x128xf32, #tpu.memory_space<vmem>>, vector<16x128xf32>
    %4 = arith.negf %3 : vector<16x128xf32>
    %5 = math.exp %4 : vector<16x128xf32>
    %cst = arith.constant 1.000000e+00 : f32
    %6 = vector.broadcast %cst : f32 to vector<16x128xf32>
    %7 = arith.addf %6, %5 : vector<16x128xf32>
    %8 = arith.divf %6, %7 : vector<16x128xf32>
    %c0_2 = arith.constant 0 : index
    %c0_3 = arith.constant 0 : index
    %9 = vector.load %arg2[%c0_2, %c0_3] : memref<16x128xf32, #tpu.memory_space<vmem>>, vector<16x128xf32>
    %10 = arith.addf %8, %9 : vector<16x128xf32>
    %11 = arith.mulf %8, %9 : vector<16x128xf32>
    %c0_4 = arith.constant 0 : index
    %c0_5 = arith.constant 0 : index
    %12 = vector.load %arg4[%c0_4, %c0_5] : memref<8x128xf32, #tpu.memory_space<vmem>>, vector<8x128xf32>
    %13 = vector.shape_cast %10 : vector<16x128xf32> to vector<2x8x128xf32>
    %cst_6 = arith.constant dense<0.000000e+00> : vector<8x128xf32>
    %14 = vector.multi_reduction <add>, %13, %cst_6 [0] : vector<2x8x128xf32> to vector<8x128xf32>
    %15 = arith.addf %12, %14 : vector<8x128xf32>
    %c0_7 = arith.constant 0 : index
    %c0_8 = arith.constant 0 : index
    %16 = vector.load %arg4[%c0_7, %c0_8] : memref<8x128xf32, #tpu.memory_space<vmem>>, vector<8x128xf32>
    tpu.vector_store %arg4[%c0_7, %c0_8], %15 {strides = array<i32>} : memref<8x128xf32, #tpu.memory_space<vmem>>, vector<8x128xf32>,
    %c0_9 = arith.constant 0 : index
    %c0_10 = arith.constant 0 : index
    %17 = vector.load %arg5[%c0_9, %c0_10] : memref<8x128xf32, #tpu.memory_space<vmem>>, vector<8x128xf32>
    %18 = vector.shape_cast %11 : vector<16x128xf32> to vector<2x8x128xf32>
    %cst_11 = arith.constant dense<0.000000e+00> : vector<8x128xf32>
    %19 = vector.multi_reduction <add>, %18, %cst_11 [0] : vector<2x8x128xf32> to vector<8x128xf32>
    %20 = arith.addf %17, %19 : vector<8x128xf32>
    %c0_12 = arith.constant 0 : index
    %c0_13 = arith.constant 0 : index
    %21 = vector.load %arg5[%c0_12, %c0_13] : memref<8x128xf32, #tpu.memory_space<vmem>>, vector<8x128xf32>
    tpu.vector_store %arg5[%c0_12, %c0_13], %20 {strides = array<i32>} : memref<8x128xf32, #tpu.memory_space<vmem>>, vector<8x128xf32>,
    %c0_i32_14 = arith.constant 0 : i32
    %22 = arith.cmpi eq, %arg0, %c0_i32_14 : i32
    %23 = arith.extui %22 : i1 to i32
    %c0_i32_15 = arith.constant 0 : i32
    %24 = arith.cmpi ne, %23, %c0_i32_15 : i32
    scf.if %24 {
      %c0_16 = arith.constant 0 : index
      %c0_17 = arith.constant 0 : index
      %25 = vector.load %arg4[%c0_16, %c0_17] : memref<8x128xf32, #tpu.memory_space<vmem>>, vector<8x128xf32>
      %26 = vector.shape_cast %25 : vector<8x128xf32> to vector<1x8x128xf32>
      %cst_18 = arith.constant dense<0.000000e+00> : vector<1xf32>
      %27 = vector.multi_reduction <add>, %26, %cst_18 [1, 2] : vector<1x8x128xf32> to vector<1xf32>
      %28 = vector.shape_cast %27 : vector<1xf32> to vector<1x1x1xf32>
      %29 = vector.extract %28[0, 0, 0] : f32 from vector<1x1x1xf32>
      %c0_19 = arith.constant 0 : index
      %c0_20 = arith.constant 0 : index
      %30 = vector.load %arg5[%c0_19, %c0_20] : memref<8x128xf32, #tpu.memory_space<vmem>>, vector<8x128xf32>
      %31 = vector.shape_cast %30 : vector<8x128xf32> to vector<1x8x128xf32>
      %cst_21 = arith.constant dense<0.000000e+00> : vector<1xf32>
      %32 = vector.multi_reduction <add>, %31, %cst_21 [1, 2] : vector<1x8x128xf32> to vector<1xf32>
      %33 = vector.shape_cast %32 : vector<1xf32> to vector<1x1x1xf32>
      %34 = vector.extract %33[0, 0, 0] : f32 from vector<1x1x1xf32>
      %cst_22 = arith.constant 2.000000e+00 : f32
      %35 = arith.mulf %cst_22, %34 : f32
      %36 = arith.subf %29, %35 : f32
      %cst_23 = arith.constant 9.99999997E-7 : f32
      %37 = arith.addf %29, %cst_23 : f32
      %38 = arith.divf %36, %37 : f32
      %c0_24 = arith.constant 0 : index
      %c0_25 = arith.constant 0 : index
      %39 = memref.load %arg3[%c0_24, %c0_25] : memref<1x1xf32, #tpu.memory_space<smem>>
      memref.store %38, %arg3[%c0_24, %c0_25] : memref<1x1xf32, #tpu.memory_space<smem>>
    } else {
    }
    return
  }
  func.func @transform_0(%arg0: i32) -> (i32, i32) {
    %c0_i32 = arith.constant 0 : i32
    %c0_i32_0 = arith.constant 0 : i32
    return %arg0, %c0_i32 : i32, i32
  }
  func.func @transform_1(%arg0: i32) -> (i32, i32) {
    %c0_i32 = arith.constant 0 : i32
    %c0_i32_0 = arith.constant 0 : i32
    return %arg0, %c0_i32 : i32, i32
  }
  func.func @transform_2(%arg0: i32) -> (i32, i32) {
    %c0_i32 = arith.constant 0 : i32
    %c0_i32_0 = arith.constant 0 : i32
    %c0_i32_1 = arith.constant 0 : i32
    return %c0_i32, %c0_i32_0 : i32, i32
  }
}

</mosaic_0001>

<llo_original>
// kernel: tpu_custom_call.1
$region0: #{tpu_custom_call.1}
  #allocation0 [shape = 'u32[]', space=smem, size = 0x4, offset = 0x4, fixed_abs, tag = 'smem constant byte address 0x4 - core index']
  #allocation1 [shape = 'u32[144,128]{1,0:T(1,128)}', space=vmem, size = 0x12000, scoped, tag = 'internal scratch']
  #allocation2 [shape = 'f32[8,128]{1,0:T(8,128)}', space=vmem, size = 0x1000, scoped, tag = 'scratch operand']
  #allocation3 [shape = 'f32[8,128]{1,0:T(8,128)}', space=vmem, size = 0x1000, scoped, tag = 'scratch operand']
  %s0 = inlined_call_operand.hbm [shape: f32[16,128], index: 0, kind: input, shape index: {}]
  %s1 = inlined_call_operand.hbm [shape: f32[16,128], index: 1, kind: input, shape index: {}]
  %s2 = inlined_call_operand.hbm [shape: f32[1,1], index: 2, kind: output, shape index: {}]
  %s3 = sld [smem:[#allocation0]]
  $region34: #{tpu_custom_call.1} parent=0
    _
  %s5 = ssub.s32 1, %s3
  %s6 = scalar_select 0, %s5, %s3
  $region1: #{tpu_custom_call.1} parent=0
    #allocation4 [shape = 'u8[8192]{0}', space=vmem, size = 0x2000, scoped, tag = 'input window, operand 0, single buffered']
    #allocation5 [shape = 's32[1]{0}', space=sflag, size = 0x4, scoped, tag = 'scoped memory for tpu_custom_call.1']
    #allocation6 [shape = 's32[1]{0}', space=sflag, size = 0x4, scoped, tag = 'scoped memory for tpu_custom_call.1']
    #allocation7 [shape = 'u8[8192]{0}', space=vmem, size = 0x2000, scoped, tag = 'input window, operand 1, single buffered']
    #allocation8 [shape = 's32[1]{0}', space=sflag, size = 0x4, scoped, tag = 'scoped memory for tpu_custom_call.1']
    #allocation9 [shape = 'u8[512]{0}', space=smem, size = 0x200, scoped, tag = 'output window, operand 0, single buffered']
    %7 = vsyncpa [#allocation5], 0
    %8 = vsyncpa [#allocation8], 0
    %9 = vsyncpa [#allocation6], 0
    // Predicated region
    $region2: #{tpu_custom_call.1} parent=1 // pred_check
      _
    $region3: #{tpu_custom_call.1} parent=1 // pred_check_branch
      %11 = sbr.rel (0) target = $region5
    $region4: #{tpu_custom_call.1} parent=1 // pred_region
      %s13 = ssub.s32 256, 256
      %14 = vsyncadd [#allocation5], %s13
      %s15 = sshll.u32 [#allocation4], 4
      %s16 = int_to_ptr.vmem [resolvable:$true] %s15
      %21 = dma.hbm_to_vmem [thread:$0]  %s0, 256, %s16, [#allocation5], 128, 128, 8
    $region5: #{tpu_custom_call.1} parent=1 // pred_fallthru
      _
    // Predicated region
    $region6: #{tpu_custom_call.1} parent=1 // pred_check
      _
    $region7: #{tpu_custom_call.1} parent=1 // pred_check_branch
      %23 = sbr.rel (0) target = $region9
    $region8: #{tpu_custom_call.1} parent=1 // pred_region
      %s25 = ssub.s32 256, 256
      %26 = vsyncadd [#allocation8], %s25
      %s27 = sshll.u32 [#allocation7], 4
      %s28 = int_to_ptr.vmem [resolvable:$true] %s27
      %33 = dma.hbm_to_vmem [thread:$0]  %s1, 256, %s28, [#allocation8], 128, 128, 8
    $region9: #{tpu_custom_call.1} parent=1 // pred_fallthru
      _
    // Predicated region
    $region10: #{tpu_custom_call.1} parent=1 // pred_check
      _
    $region11: #{tpu_custom_call.1} parent=1 // pred_check_branch
      %35 = sbr.rel (0) target = $region13
    $region12: #{tpu_custom_call.1} parent=1 // pred_region
      %36 = dma.done [#allocation5], 256
    $region13: #{tpu_custom_call.1} parent=1 // pred_fallthru
      _
    // Predicated region
    $region14: #{tpu_custom_call.1} parent=1 // pred_check
      _
    $region15: #{tpu_custom_call.1} parent=1 // pred_check_branch
      %38 = sbr.rel (0) target = $region17
    $region16: #{tpu_custom_call.1} parent=1 // pred_region
      %39 = dma.done [#allocation8], 256
    $region17: #{tpu_custom_call.1} parent=1 // pred_fallthru
      _
    %p40 = scmp.eq.s32.totalorder 0, 0
    // Predicated region
    $region18: #{tpu_custom_call.1} parent=1 // pred_check
      %p41 = pneg %p40
    $region19: #{tpu_custom_call.1} parent=1 // pred_check_branch
      %43 = sbr.rel (%p41) target = $region21
    $region20: #{tpu_custom_call.1} parent=1 // pred_region
      %44 = vst [vmem:[#allocation2] sm:$0xff] 0.0
      %45 = vst [vmem:[#allocation3] sm:$0xff] 0.0
    $region21: #{tpu_custom_call.1} parent=1 // pred_fallthru
      _
    %v46 = vld [vmem:[#allocation4] sm:$0xff]
    %v47 = vld [vmem:[#allocation4 + $0x8] sm:$0xff]
    %v48 = vxor.u32 %v46, 2147483648
    %v49 = vxor.u32 %v47, 2147483648
    %v50 = vmul.f32 %v48, 1.442695
    %v51 = vpow.pop %v50
    %v52 = vmul.f32 %v49, 1.442695
    %v53 = vpow.pop %v52
    %v54 = vadd.f32 %v51, 1.0
    %v55 = vadd.f32 %v53, 1.0
    %v56 = vrcp.pop %v54
    %v57 = vmul.f32 1.0, %v56
    %v58 = vrcp.pop %v55
    %v59 = vmul.f32 1.0, %v58
    %v60 = vld [vmem:[#allocation7] sm:$0xff]
    %v61 = vld [vmem:[#allocation7 + $0x8] sm:$0xff]
    %v62 = vadd.f32 %v57, %v60
    %v63 = vadd.f32 %v59, %v61
    %v64 = vmul.f32 %v57, %v60
    %v65 = vmul.f32 %v59, %v61
    %v66 = vld [vmem:[#allocation2] sm:$0xff]
    %v67 = vadd.f32 %v62, %v63
    %v68 = vadd.f32 %v66, %v67
    %69 = vst [vmem:[#allocation2] sm:$0xff] %v68
    %v70 = vld [vmem:[#allocation3] sm:$0xff]
    %v71 = vadd.f32 %v64, %v65
    %v72 = vadd.f32 %v70, %v71
    %73 = vst [vmem:[#allocation3] sm:$0xff] %v72
    // Predicated region
    $region22: #{tpu_custom_call.1} parent=1 // pred_check
      %p74 = pneg %p40
    $region23: #{tpu_custom_call.1} parent=1 // pred_check_branch
      %76 = sbr.rel (%p74) target = $region25
    $region24: #{tpu_custom_call.1} parent=1 // pred_region
      %v77 = vld [vmem:[#allocation2] sm:$0xff]
      %78 = vadd.xlane.f32.xlu0 %v77
      %v79 = vpop.xlane.xlu0 %78
      %v80 = vrot.slane %v79, 4
      %v81 = vadd.f32 %v79, %v80
      %v82 = vrot.slane %v81, 2
      %v83 = vadd.f32 %v81, %v82
      %v84 = vrot.slane %v83, 1
      %v85 = vadd.f32 %v83, %v84
      %s86 = vtos %v85
      %v87 = vld [vmem:[#allocation3] sm:$0xff]
      %88 = vadd.xlane.f32.xlu0 %v87
      %v89 = vpop.xlane.xlu0 %88
      %v90 = vrot.slane %v89, 4
      %v91 = vadd.f32 %v89, %v90
      %v92 = vrot.slane %v91, 2
      %v93 = vadd.f32 %v91, %v92
      %v94 = vrot.slane %v93, 1
      %v95 = vadd.f32 %v93, %v94
      %s96 = vtos %v95
      %s97 = smul.f32 %s96, 2.0
      %s98 = ssub.f32 %s86, %s97
      %s99 = sadd.f32 %s86, 1e-06
      %v100 = vstv %s99
      %v101 = vrcp.pop %v100
      %s102 = vtos %v101
      %s103 = smul.f32 %s98, %s102
      %s104 = scalar_lea.smem [#allocation9], 0
      %105 = sst [smem:[%s104]] %s103
    $region25: #{tpu_custom_call.1} parent=1 // pred_fallthru
      _
    // Predicated region
    $region26: #{tpu_custom_call.1} parent=1 // pred_check
      _
    $region27: #{tpu_custom_call.1} parent=1 // pred_check_branch
      %107 = sbr.rel (0) target = $region29
    $region28: #{tpu_custom_call.1} parent=1 // pred_region
      %s109 = ssub.s32 16, 16
      %110 = vsyncadd [#allocation6], %s109
      %113 = dma.smem_to_hbm [#allocation9], 16, %s2, [#allocation6]
    $region29: #{tpu_custom_call.1} parent=1 // pred_fallthru
      _
    // Predicated region
    $region30: #{tpu_custom_call.1} parent=1 // pred_check
      _
    $region31: #{tpu_custom_call.1} parent=1 // pred_check_branch
      %115 = sbr.rel (0) target = $region33
    $region32: #{tpu_custom_call.1} parent=1 // pred_region
      %116 = dma.done [#allocation6], 16
    $region33: #{tpu_custom_call.1} parent=1 // pred_fallthru
      _
    %117 = sfence
    %118 = vsyncpa [#allocation5], 1
    %119 = vsyncpa [#allocation8], 1
    %120 = vsyncpa [#allocation6], 1

</llo_original>
